<compile_context>
chip_gen: v6e
topology: v6e:2x2x1
jax: 0.10.0
libtpu: 0.0.40
codegen_flags: <defaults>
</compile_context>

<pallas_src>
import jax
import jax.numpy as jnp
from jax.experimental import pallas as pl
from jax.experimental.pallas import tpu as pltpu

_LANE = 128
_TARGET_BLOCK_BYTES = 2 << 20      # ~2 MiB per operand tile
_VMEM_LIMIT_BYTES = 32 * 1024 * 1024


def _add_pos_kernel(x_ref, e_ref, o_ref):
    # x_ref/o_ref: (tb, tr, C); e_ref: (1, tr, C) -> broadcast over the batch-tile dim.
    # Promotion/cast happens in-kernel (VPU slack), not via a wrapper-side astype.
    o_ref[...] = (x_ref[...] + e_ref[...]).astype(o_ref.dtype)


def _choose_tiles(B, R, C, itemsize):
    """Pick (tb, tr): batch-elements and rows per block, ~_TARGET_BLOCK_BYTES per x-tile."""
    slab_bytes = R * C * itemsize  # one batch element, lane-dense
    if slab_bytes >= _TARGET_BLOCK_BYTES:
        # One batch element per block; tile the row axis (multiple of 8 sublanes).
        tb = 1
        target_rows = max(8, _TARGET_BLOCK_BYTES // (C * itemsize))
        tr = min(R, max(8, (target_rows // 8) * 8))
    else:
        # Fold several batch elements into one block to amortize per-step overhead.
        tr = R
        tb = min(B, max(1, _TARGET_BLOCK_BYTES // max(1, slab_bytes)))

    # Megacore: keep >= 2 grid points when possible so both v7x TensorCores get work.
    if pl.cdiv(R, tr) * pl.cdiv(B, tb) < 2:
        if B >= 2:
            tb = pl.cdiv(B, 2)
        elif R >= 16:
            tr = max(8, ((pl.cdiv(R, 2) + 7) // 8) * 8)
    return tb, tr


def _broadcast_add(x3, e3, out_dtype, donate_x):
    """x3: (B, R, C); e3: (1, R, C) -> (B, R, C) of out_dtype (x3 + e3 broadcast over B)."""
    B, R, C = x3.shape
    itemsize = max(
        jnp.dtype(x3.dtype).itemsize,
        jnp.dtype(e3.dtype).itemsize,
        jnp.dtype(out_dtype).itemsize,
    )
    tb, tr = _choose_tiles(B, R, C, itemsize)
    grid = (pl.cdiv(R, tr), pl.cdiv(B, tb))  # batch-tile axis innermost: embed tile
    #                                          stays VMEM-resident while it advances.

    kwargs = {}
    if donate_x and jnp.dtype(x3.dtype) == jnp.dtype(out_dtype):
        # Only safe/beneficial when the caller donates x (or x3 is an intermediate).
        kwargs["input_output_aliases"] = {0: 0}

    return pl.pallas_call(
        _add_pos_kernel,
        out_shape=jax.ShapeDtypeStruct((B, R, C), out_dtype),
        grid_spec=pltpu.PrefetchScalarGridSpec(
            num_scalar_prefetch=0,
            grid=grid,
            in_specs=[
                # x: distinct tile per (row-tile, batch-tile) grid point.
                pl.BlockSpec((tb, tr, C), lambda j, b: (b, j, 0)),
                # embed: index_map ignores b -> not re-fetched while only b advances.
                pl.BlockSpec((1, tr, C), lambda j, b: (0, j, 0)),
            ],
            out_specs=pl.BlockSpec((tb, tr, C), lambda j, b: (b, j, 0)),
        ),
        compiler_params=pltpu.CompilerParams(
            dimension_semantics=("parallel", "parallel"),
            vmem_limit_bytes=_VMEM_LIMIT_BYTES,
        ),
        **kwargs,
    )(x3, e3)


def vit_pos_embed_2d(x, embed, allow_interpolation=True, keep_x_dtype=False,
                     donate_x=False):
    """Forward of VitPosEmbed2d.

    x: (B, H, W, D) array; embed: (1, Hs, Ws, D) parameter.
    keep_x_dtype=True deviates from torch type promotion (keeps out in x.dtype).
    donate_x=True aliases x's buffer as the output (only if the caller donates x).
    """
    B, H, W, D = x.shape
    _, Hs, Ws, De = embed.shape
    assert D == De

    if (H, W) != (Hs, Ws):
        assert allow_interpolation
        # TODO(synk): jax.image.resize 'cubic' uses the Keys kernel (a=-0.5) while torch
        # F.interpolate(bicubic) uses a=-0.75; resized embeddings differ slightly.
        embed = jax.image.resize(embed, (1, H, W, D), method="cubic")

    out_dtype = x.dtype if keep_x_dtype else jnp.promote_types(x.dtype, embed.dtype)

    # Lane-dense view: flatten each image to a vector, pad to a multiple of 128 if
    # needed, and view as (rows, 128) so every vreg/DMA descriptor is full-width.
    L = H * W * D
    pad = (-L) % _LANE
    x_flat = x.reshape(B, L)
    e_flat = embed.reshape(1, L)
    if pad:
        x_flat = jnp.pad(x_flat, ((0, 0), (0, pad)))
        e_flat = jnp.pad(e_flat, ((0, 0), (0, pad)))
    Lp = L + pad
    x3 = x_flat.reshape(B, Lp // _LANE, _LANE)
    e3 = e_flat.reshape(1, Lp // _LANE, _LANE)

    out = _broadcast_add(x3, e3, out_dtype, donate_x)

    if pad:
        return out.reshape(B, Lp)[:, :L].reshape(B, H, W, D)
    return out.reshape(B, H, W, D)


def init_vit_pos_embed_2d(key, seqlens, dim, std=0.02):
    """Matches nn.init.trunc_normal_(embed, std=0.02): truncation bounds are ABSOLUTE
    +/-2 (i.e. +/-100 sigma for std=0.02), so truncation essentially never triggers."""
    shape = (1, *seqlens, dim)
    lo, hi = -2.0 / std, 2.0 / std  # convert absolute bounds to standard-normal space
    e = jax.random.truncated_normal(key, lo, hi, shape, dtype=jnp.float32) * std
    return e


if __name__ == "__main__":
    key = jax.random.PRNGKey(0)
    k_embed, k_x, k_embed2, k_x2 = jax.random.split(key, 4)

    # --- check 1: lane-aligned shape (H*W*D % 128 == 0), batch-folded tiles ---
    B, H, W, D = 2, 16, 16, 32
    embed = init_vit_pos_embed_2d(k_embed, (H, W), D)             # (1, 16, 16, 32)
    x = jax.random.normal(k_x, (B, H, W, D), dtype=jnp.float32)   # (2, 16, 16, 32)

    out = jax.block_until_ready(vit_pos_embed_2d(x, embed))
    ref = x + embed
    assert out.shape == x.shape and out.dtype == ref.dtype
    assert jnp.allclose(out, ref, atol=1e-6, rtol=1e-6)

    # --- check 2: non-aligned shape (H*W*D % 128 != 0) exercises the pad path ---
    B2, H2, W2, D2 = 2, 7, 7, 33
    embed2 = init_vit_pos_embed_2d(k_embed2, (H2, W2), D2)            # (1, 7, 7, 33)
    x2 = jax.random.normal(k_x2, (B2, H2, W2, D2), dtype=jnp.float32)

    out2 = jax.block_until_ready(vit_pos_embed_2d(x2, embed2))
    ref2 = x2 + embed2
    assert out2.shape == x2.shape and out2.dtype == ref2.dtype
    assert jnp.allclose(out2, ref2, atol=1e-6, rtol=1e-6)

    print("KERNEL_OK")
</pallas_src>

<mosaic_0001>
module attributes {stable_mosaic.version = 11 : i64} {
  func.func @_add_pos_kernel(%arg0: i32, %arg1: i32, %arg2: memref<1x64x128xf32, #tpu.memory_space<vmem>>, %arg3: memref<1x64x128xf32, #tpu.memory_space<vmem>>, %arg4: memref<1x64x128xf32, #tpu.memory_space<vmem>>) attributes {dimension_semantics = [#tpu.dimension_semantics<parallel>, #tpu.dimension_semantics<parallel>], iteration_bounds = array<i64: 1, 2>, scalar_prefetch = 0 : i64, scratch_operands = 0 : i64, tpu.core_type = #tpu.core_type<tc>, window_params = [{transform_indices = @transform_0, window_bounds = array<i64: 1, 64, 128>}, {transform_indices = @transform_1, window_bounds = array<i64: 1, 64, 128>}, {transform_indices = @transform_2, window_bounds = array<i64: 1, 64, 128>}]} {
    %c0 = arith.constant 0 : index
    %c0_0 = arith.constant 0 : index
    %c0_1 = arith.constant 0 : index
    %0 = vector.load %arg2[%c0, %c0_0, %c0_1] : memref<1x64x128xf32, #tpu.memory_space<vmem>>, vector<1x64x128xf32>
    %c0_2 = arith.constant 0 : index
    %c0_3 = arith.constant 0 : index
    %c0_4 = arith.constant 0 : index
    %1 = vector.load %arg3[%c0_2, %c0_3, %c0_4] : memref<1x64x128xf32, #tpu.memory_space<vmem>>, vector<1x64x128xf32>
    %2 = arith.addf %0, %1 : vector<1x64x128xf32>
    %c0_5 = arith.constant 0 : index
    %c0_6 = arith.constant 0 : index
    %c0_7 = arith.constant 0 : index
    %3 = vector.load %arg4[%c0_5, %c0_6, %c0_7] : memref<1x64x128xf32, #tpu.memory_space<vmem>>, vector<1x64x128xf32>
    tpu.vector_store %arg4[%c0_5, %c0_6, %c0_7], %2 {strides = array<i32>} : memref<1x64x128xf32, #tpu.memory_space<vmem>>, vector<1x64x128xf32>,
    return
  }
  func.func @transform_0(%arg0: i32, %arg1: i32) -> (i32, i32, i32) {
    %c0_i32 = arith.constant 0 : i32
    %c0_i32_0 = arith.constant 0 : i32
    return %arg1, %arg0, %c0_i32 : i32, i32, i32
  }
  func.func @transform_1(%arg0: i32, %arg1: i32) -> (i32, i32, i32) {
    %c0_i32 = arith.constant 0 : i32
    %c0_i32_0 = arith.constant 0 : i32
    %c0_i32_1 = arith.constant 0 : i32
    return %c0_i32, %arg0, %c0_i32_0 : i32, i32, i32
  }
  func.func @transform_2(%arg0: i32, %arg1: i32) -> (i32, i32, i32) {
    %c0_i32 = arith.constant 0 : i32
    %c0_i32_0 = arith.constant 0 : i32
    return %arg1, %arg0, %c0_i32 : i32, i32, i32
  }
}

</mosaic_0001>

<llo_original>
// kernel: tpu_custom_call.1
$region0: #{tpu_custom_call.1}
  #allocation0 [shape = 'u32[]', space=smem, size = 0x4, offset = 0x4, fixed_abs, tag = 'smem constant byte address 0x4 - core index']
  #allocation1 [shape = 'u32[144,128]{1,0:T(1,128)}', space=vmem, size = 0x12000, scoped, tag = 'internal scratch']
  %s0 = inlined_call_operand.hbm [shape: f32[2,64,128], index: 0, kind: input, shape index: {}]
  %s1 = inlined_call_operand.hbm [shape: f32[1,64,128], index: 1, kind: input, shape index: {}]
  %s2 = inlined_call_operand.hbm [shape: f32[2,64,128], index: 2, kind: output, shape index: {}]
  %s3 = sld [smem:[#allocation0]]
  $region49: #{tpu_custom_call.1} parent=0
    _
  %s5 = ssub.s32 1, %s3
  %s6 = scalar_select 0, %s5, %s3
  $region1: #{tpu_custom_call.1} parent=0
    #allocation2 [shape = 'u8[65536]{0}', space=vmem, size = 0x10000, scoped, tag = 'input window, operand 0']
    #allocation3 [shape = 's32[2]{0}', space=sflag, size = 0x8, scoped, tag = 'scoped memory for tpu_custom_call.1']
    #allocation4 [shape = 's32[2]{0}', space=sflag, size = 0x8, scoped, tag = 'scoped memory for tpu_custom_call.1']
    #allocation5 [shape = 'u8[32768]{0}', space=vmem, size = 0x8000, scoped, tag = 'input window, operand 1, single buffered']
    #allocation6 [shape = 's32[1]{0}', space=sflag, size = 0x4, scoped, tag = 'scoped memory for tpu_custom_call.1']
    #allocation7 [shape = 'u8[65536]{0}', space=vmem, size = 0x10000, scoped, tag = 'output window, operand 0']
    %7 = vsyncpa [#allocation3], 0
    %s8 = scalar_lea.sflag [#allocation3], 1
    %9 = vsyncpa %s8, 0
    %10 = vsyncpa [#allocation6], 0
    %11 = vsyncpa [#allocation4], 0
    %s12 = scalar_lea.sflag [#allocation4], 1
    %13 = vsyncpa %s12, 0
    loop: start=0, step=1, limit=4
    $region2: #{tpu_custom_call.1} parent=1 // loop_pre_header
      _
    $region3: #{tpu_custom_call.1} parent=1 // loop_header
      %s15 = sphi 0, %s19
      %p16 = scmp.ge.s32.totalorder %s15, 4
      %s22 = sphi 0, %s34
      %s23 = sphi 0, %s30
      %s24 = sphi 0, %s22
      %s25 = sphi 0, %s23
      %s26 = sphi 0, %s24
      %s27 = sphi 0, %s25
      %s39 = sphi 0, %s41
      %s42 = sphi 0, %s39
      %s43 = sphi 0, %s42
      %s59 = sphi 0, %s43
      %s65 = sphi 0, %s67
      %s68 = sphi 0, %s65
      %s69 = sphi 0, %s68
      %s85 = sphi 0, %s69
      %s93 = sphi 0, %s95
      %s96 = sphi 0, %s93
      %s97 = sphi 0, %s96
      %s113 = sphi 0, %s97
    $region4: #{tpu_custom_call.1} parent=1 // loop_header_branch
      %18 = sbr.rel (%p16) target = $region8
    $region5: #{tpu_custom_call.1} parent=1 // loop_body
      %s20 = ssub.s32 %s15, 1
      %s21 = ssub.s32 %s15, 2
      %s28 = sadd.s32 1, %s23
      %p29 = scmp.ge.s32.totalorder %s28, 2
      %s30 = scalar_select %p29, 0, %s28
      %s31 = sadd.s32 1, %s22
      %s32 = scalar_select %p29, %s31, %s22
      %p33 = scmp.ge.s32.totalorder %s32, 1
      %s34 = scalar_select %p33, 0, %s32
      %s35 = ssub.s32 %s23, %s30
      %s36 = ssub.s32 %s22, %s34
      %s37 = sor.u32 %s35, %s36
      %p38 = scmp.eq.s32.totalorder %s37, 0
      %s40 = sadd.s32 %s39, 1
      %s41 = scalar_select %p38, %s39, %s40
      %p44 = pneg %p38
      %p45 = scmp.eq.s32.totalorder %s15, 1
      %p46 = por %p44, %p45
      %p47 = scmp.ne.s32.totalorder %s39, %s42
      %p48 = scmp.eq.s32.totalorder %s15, 0
      %p49 = por %p47, %p48
      %p50 = scmp.ne.s32.totalorder %s39, %s42
      %p51 = scmp.eq.s32.totalorder %s20, 1
      %p52 = por %p50, %p51
      %p53 = scmp.ne.s32.totalorder %s42, %s43
      %p54 = scmp.eq.s32.totalorder %s20, 0
      %p55 = por %p53, %p54
      %p56 = scmp.ne.s32.totalorder %s42, %s43
      %p57 = scmp.eq.s32.totalorder %s21, 1
      %p58 = por %p56, %p57
      %p60 = scmp.ne.s32.totalorder %s43, %s59
      %p61 = scmp.eq.s32.totalorder %s21, 0
      %p62 = por %p60, %p61
      %s63 = ssub.s32 %s22, %s34
      %p64 = scmp.eq.s32.totalorder %s63, 0
      %s66 = sadd.s32 %s65, 1
      %s67 = scalar_select %p64, %s65, %s66
      %p70 = pneg %p64
      %p71 = scmp.eq.s32.totalorder %s15, 1
      %p72 = por %p70, %p71
      %p73 = scmp.ne.s32.totalorder %s65, %s68
      %p74 = scmp.eq.s32.totalorder %s15, 0
      %p75 = por %p73, %p74
      %p76 = scmp.ne.s32.totalorder %s65, %s68
      %p77 = scmp.eq.s32.totalorder %s20, 1
      %p78 = por %p76, %p77
      %p79 = scmp.ne.s32.totalorder %s68, %s69
      %p80 = scmp.eq.s32.totalorder %s20, 0
      %p81 = por %p79, %p80
      %p82 = scmp.ne.s32.totalorder %s68, %s69
      %p83 = scmp.eq.s32.totalorder %s21, 1
      %p84 = por %p82, %p83
      %p86 = scmp.ne.s32.totalorder %s69, %s85
      %p87 = scmp.eq.s32.totalorder %s21, 0
      %p88 = por %p86, %p87
      %s89 = ssub.s32 %s23, %s30
      %s90 = ssub.s32 %s22, %s34
      %s91 = sor.u32 %s89, %s90
      %p92 = scmp.eq.s32.totalorder %s91, 0
      %s94 = sadd.s32 %s93, 1
      %s95 = scalar_select %p92, %s93, %s94
      %p98 = pneg %p92
      %p99 = scmp.eq.s32.totalorder %s15, 1
      %p100 = por %p98, %p99
      %p101 = scmp.ne.s32.totalorder %s93, %s96
      %p102 = scmp.eq.s32.totalorder %s15, 0
      %p103 = por %p101, %p102
      %p104 = scmp.ne.s32.totalorder %s93, %s96
      %p105 = scmp.eq.s32.totalorder %s20, 1
      %p106 = por %p104, %p105
      %p107 = scmp.ne.s32.totalorder %s96, %s97
      %p108 = scmp.eq.s32.totalorder %s20, 0
      %p109 = por %p107, %p108
      %p110 = scmp.ne.s32.totalorder %s96, %s97
      %p111 = scmp.eq.s32.totalorder %s21, 1
      %p112 = por %p110, %p111
      %p114 = scmp.ne.s32.totalorder %s97, %s113
      %p115 = scmp.eq.s32.totalorder %s21, 0
      %p116 = por %p114, %p115
      %p117 = scmp.le.s32.totalorder 1, %s15
      %p118 = scmp.lt.s32.totalorder %s15, 3
      %p119 = pnand %p117, %p118
      %p120 = pneg %p119
      // Predicated region
      $region9: #{tpu_custom_call.1} parent=5 // pred_check
        _
      $region10: #{tpu_custom_call.1} parent=5 // pred_check_branch
        %122 = sbr.rel (%p119) target = $region12
      $region11: #{tpu_custom_call.1} parent=5 // pred_region
        %s123 = ssub.s32 %s15, 1
        // Predicated region
        $region13: #{tpu_custom_call.1} parent=11 // pred_check
          %p124 = pneg %p81
        $region14: #{tpu_custom_call.1} parent=11 // pred_check_branch
          %126 = sbr.rel (%p124) target = $region16
        $region15: #{tpu_custom_call.1} parent=11 // pred_region
          %s127 = smul.u32 8, %s24
          %s129 = ssub.s32 1024, 1024
          %130 = vsyncadd [#allocation6], %s129
          %s131 = smul.addr %s127, 128
          %s132 = scalar_lea.hbm %s1, %s131
          %s133 = sshll.u32 [#allocation5], 4
          %s134 = int_to_ptr.vmem [resolvable:$true] %s133
          %139 = dma.hbm_to_vmem [thread:$0]  %s132, 1024, %s134, [#allocation6], 128, 128, 8
        $region16: #{tpu_custom_call.1} parent=11 // pred_fallthru
          _
      $region12: #{tpu_custom_call.1} parent=5 // pred_fallthru
        _
      %p140 = scmp.lt.s32.totalorder %s15, 2
      // Predicated region
      $region17: #{tpu_custom_call.1} parent=5 // pred_check
        %p141 = pneg %p140
      $region18: #{tpu_custom_call.1} parent=5 // pred_check_branch
        %143 = sbr.rel (%p141) target = $region20
      $region19: #{tpu_custom_call.1} parent=5 // pred_region
        // Predicated region
        $region21: #{tpu_custom_call.1} parent=19 // pred_check
          %p144 = pneg %p49
        $region22: #{tpu_custom_call.1} parent=19 // pred_check_branch
          %146 = sbr.rel (%p144) target = $region24
        $region23: #{tpu_custom_call.1} parent=19 // pred_region
          %s147 = sand.u32 %s39, 1
          %s148 = scalar_lea.sflag [#allocation3], %s147
          %s149 = sand.u32 %s39, 1
          %s150 = smul.addr %s149, 64
          %s151 = scalar_lea.vmem [#allocation2], %s150
          %s152 = smul.u32 8, %s22
          %s154 = ssub.s32 1024, 1024
          %155 = vsyncadd %s148, %s154
          %s156 = smul.addr %s23, 8
          %s157 = sadd.s32 %s152, %s156
          %s158 = smul.addr %s157, 128
          %s159 = scalar_lea.hbm %s0, %s158
          %s160 = sshll.u32 %s151, 4
          %s161 = int_to_ptr.vmem [resolvable:$true] %s160
          %166 = dma.hbm_to_vmem [thread:$0]  %s159, 1024, %s161, %s148, 128, 128, 8
        $region24: #{tpu_custom_call.1} parent=19 // pred_fallthru
          _
      $region20: #{tpu_custom_call.1} parent=5 // pred_fallthru
        _
      %p167 = scmp.le.s32.totalorder 1, %s15
      %p168 = scmp.lt.s32.totalorder %s15, 3
      %p169 = pnand %p167, %p168
      %p170 = pneg %p169
      // Predicated region
      $region25: #{tpu_custom_call.1} parent=5 // pred_check
        _
      $region26: #{tpu_custom_call.1} parent=5 // pred_check_branch
        %172 = sbr.rel (%p169) target = $region28
      $region27: #{tpu_custom_call.1} parent=5 // pred_region
        %s173 = ssub.s32 %s15, 1
        %s174 = sand.u32 %s42, 1
        %s175 = scalar_lea.sflag [#allocation3], %s174
        %s176 = sand.u32 %s42, 1
        %s177 = smul.addr %s176, 64
        %s178 = scalar_lea.vmem [#allocation2], %s177
        // Predicated region
        $region29: #{tpu_custom_call.1} parent=27 // pred_check
          %p179 = pneg %p55
        $region30: #{tpu_custom_call.1} parent=27 // pred_check_branch
          %181 = sbr.rel (%p179) target = $region32
        $region31: #{tpu_custom_call.1} parent=27 // pred_region
          %182 = dma.done %s175, 1024
        $region32: #{tpu_custom_call.1} parent=27 // pred_fallthru
          _
        // Predicated region
        $region33: #{tpu_custom_call.1} parent=27 // pred_check
          %p183 = pneg %p81
        $region34: #{tpu_custom_call.1} parent=27 // pred_check_branch
          %185 = sbr.rel (%p183) target = $region36
        $region35: #{tpu_custom_call.1} parent=27 // pred_region
          %186 = dma.done [#allocation6], 1024
        $region36: #{tpu_custom_call.1} parent=27 // pred_fallthru
          _
        %s187 = sand.u32 %s42, 1
        %s188 = scalar_lea.sflag [#allocation3], %s187
        %s189 = sand.u32 %s42, 1
        %s190 = smul.addr %s189, 64
        %s191 = scalar_lea.vmem [#allocation2], %s190
        %p192 = pneg %p55
        %p193 = pneg %p52
        %p194 = pneg %p81
        %p195 = pneg %p78
        %p196 = pneg %p109
        %p197 = pneg %p106
        %s198 = sand.u32 %s96, 1
        %s199 = scalar_lea.sflag [#allocation4], %s198
        %s200 = sand.u32 %s96, 1
        %s201 = smul.addr %s200, 64
        %s202 = scalar_lea.vmem [#allocation7], %s201
        %s203 = smul.u32 8, %s24
        %s204 = smul.u32 8, %s24
        %s205 = smul.u32 8, %s24
        %v206 = vld [vmem:[%s178] sm:$0xff]
        %v207 = vld [vmem:[%s178 + $0x8] sm:$0xff]
        %v208 = vld [vmem:[%s178 + $0x10] sm:$0xff]
        %v209 = vld [vmem:[%s178 + $0x18] sm:$0xff]
        %v210 = vld [vmem:[%s178 + $0x20] sm:$0xff]
        %v211 = vld [vmem:[%s178 + $0x28] sm:$0xff]
        %v212 = vld [vmem:[%s178 + $0x30] sm:$0xff]
        %v213 = vld [vmem:[%s178 + $0x38] sm:$0xff]
        %v214 = vld [vmem:[#allocation5] sm:$0xff]
        %v215 = vld [vmem:[#allocation5 + $0x8] sm:$0xff]
        %v216 = vld [vmem:[#allocation5 + $0x10] sm:$0xff]
        %v217 = vld [vmem:[#allocation5 + $0x18] sm:$0xff]
        %v218 = vld [vmem:[#allocation5 + $0x20] sm:$0xff]
        %v219 = vld [vmem:[#allocation5 + $0x28] sm:$0xff]
        %v220 = vld [vmem:[#allocation5 + $0x30] sm:$0xff]
        %v221 = vld [vmem:[#allocation5 + $0x38] sm:$0xff]
        %v222 = vadd.f32 %v206, %v214
        %v223 = vadd.f32 %v207, %v215
        %v224 = vadd.f32 %v208, %v216
        %v225 = vadd.f32 %v209, %v217
        %v226 = vadd.f32 %v210, %v218
        %v227 = vadd.f32 %v211, %v219
        %v228 = vadd.f32 %v212, %v220
        %v229 = vadd.f32 %v213, %v221
        %230 = vst [vmem:[%s202] sm:$0xff] %v222
        %231 = vst [vmem:[%s202 + $0x8] sm:$0xff] %v223
        %232 = vst [vmem:[%s202 + $0x10] sm:$0xff] %v224
        %233 = vst [vmem:[%s202 + $0x18] sm:$0xff] %v225
        %234 = vst [vmem:[%s202 + $0x20] sm:$0xff] %v226
        %235 = vst [vmem:[%s202 + $0x28] sm:$0xff] %v227
        %236 = vst [vmem:[%s202 + $0x30] sm:$0xff] %v228
        %237 = vst [vmem:[%s202 + $0x38] sm:$0xff] %v229
        %s238 = sand.u32 %s96, 1
        %s239 = scalar_lea.sflag [#allocation4], %s238
        %s240 = sand.u32 %s96, 1
        %s241 = smul.addr %s240, 64
        %s242 = scalar_lea.vmem [#allocation7], %s241
        // Predicated region
        $region37: #{tpu_custom_call.1} parent=27 // pred_check
          %p243 = pneg %p106
        $region38: #{tpu_custom_call.1} parent=27 // pred_check_branch
          %245 = sbr.rel (%p243) target = $region40
        $region39: #{tpu_custom_call.1} parent=27 // pred_region
          %s246 = smul.u32 8, %s24
          %s248 = ssub.s32 1024, 1024
          %249 = vsyncadd %s239, %s248
          %s250 = smul.addr %s25, 8
          %s251 = sadd.s32 %s246, %s250
          %s252 = smul.addr %s251, 128
          %s253 = scalar_lea.hbm %s2, %s252
          %s254 = sshll.u32 %s242, 4
          %s255 = int_to_ptr.vmem [resolvable:$true] %s254
          %260 = dma.vmem_to_hbm [thread:$0]  %s255, 1024, %s253, %s239, 128, 128, 8
        $region40: #{tpu_custom_call.1} parent=27 // pred_fallthru
          _
      $region28: #{tpu_custom_call.1} parent=5 // pred_fallthru
        _
      %p261 = scmp.le.s32.totalorder 2, %s15
      // Predicated region
      $region41: #{tpu_custom_call.1} parent=5 // pred_check
        %p262 = pneg %p261
      $region42: #{tpu_custom_call.1} parent=5 // pred_check_branch
        %264 = sbr.rel (%p262) target = $region44
      $region43: #{tpu_custom_call.1} parent=5 // pred_region
        %s265 = ssub.s32 %s15, 2
        // Predicated region
        $region45: #{tpu_custom_call.1} parent=43 // pred_check
          %p266 = pneg %p112
        $region46: #{tpu_custom_call.1} parent=43 // pred_check_branch
          %268 = sbr.rel (%p266) target = $region48
        $region47: #{tpu_custom_call.1} parent=43 // pred_region
          %s269 = sand.u32 %s97, 1
          %s270 = scalar_lea.sflag [#allocation4], %s269
          %s271 = sand.u32 %s97, 1
          %s272 = smul.addr %s271, 64
          %s273 = scalar_lea.vmem [#allocation7], %s272
          %274 = dma.done %s270, 1024
        $region48: #{tpu_custom_call.1} parent=43 // pred_fallthru
          _
      $region44: #{tpu_custom_call.1} parent=5 // pred_fallthru
        _
    $region6: #{tpu_custom_call.1} parent=1 // loop_footer
      %s19 = sadd.s32 1, %s15
    $region7: #{tpu_custom_call.1} parent=1 // loop_footer_branch
      %14 = sbr.rel target = $region3
    $region8: #{tpu_custom_call.1} parent=1 // loop_exit
      _
    %275 = vsyncpa [#allocation3], 1
    %s276 = scalar_lea.sflag [#allocation3], 1
    %277 = vsyncpa %s276, 1
    %278 = vsyncpa [#allocation6], 1
    %279 = vsyncpa [#allocation4], 1
    %s280 = scalar_lea.sflag [#allocation4], 1
    %281 = vsyncpa %s280, 1

</llo_original>
